<compile_context>
chip_gen: v5e
topology: v5e:2x2
jax: 0.10.0
libtpu: 0.0.40
codegen_flags: <defaults>
</compile_context>

<pallas_src>
import math

import jax
import jax.numpy as jnp
from jax.experimental import pallas as pl
from jax.experimental.pallas import tpu as pltpu


def _round_up(x: int, m: int) -> int:
    return ((x + m - 1) // m) * m


def _copy_kernel(x_ref, o_ref):
    # Grid / BlockSpecs only cover the kept vertex prefix, so the body is a
    # plain tile copy -- no in-kernel slicing (no VMEM relayouts).
    o_ref[...] = x_ref[...]


def _block_target_bytes() -> int:
    """Per-block byte target: 2-8 MiB sweet spot; bigger on v7x (3.2 TB/s HBM)."""
    try:
        kind = jax.devices()[0].device_kind.lower()
        if "v7" in kind:
            return 8 << 20
    except Exception:
        pass
    return 4 << 20


def downsamp(x: jax.Array, nv_prev: int) -> jax.Array:
    """Pallas implementation of DownSamp: x[..., :nv_prev]."""
    *lead, NV = x.shape
    assert 0 < nv_prev <= NV

    rows = math.prod(lead) if lead else 1
    x2d = x.reshape(rows, NV)
    itemsize = jnp.dtype(x.dtype).itemsize

    # Dtype-aware native sublane granularity (8 f32 / 16 bf16 / 32 int8-fp8).
    sub_align = max(8, 32 // itemsize)
    nv_pad = _round_up(nv_prev, 128)

    target = _block_target_bytes()
    max_block = 2 * target

    # Pure data movement: read + write of the kept prefix.
    bytes_accessed = int(2 * rows * nv_prev * itemsize)

    # ---------------------------------------------------------------- path A
    # Tiny mesh (12/42/162 verts) or near-full keep: a single lane block spans
    # the whole vertex axis.  Input block last dim == NV and output block last
    # dim == nv_prev (both full-extent -> always legal); the prefix slice is
    # done in VMEM.  No reliance on edge-padding an input block wider than the
    # array.
    if nv_pad >= NV:
        tn_in, tn_out = NV, nv_prev
        row_bytes = max(tn_in, tn_out) * itemsize
        tm = max(sub_align, (target // row_bytes) // sub_align * sub_align)
        tm = rows if rows <= tm else tm
        grid_m = pl.cdiv(rows, tm)
        if grid_m == 1 and rows >= 2 * sub_align:
            # v7x has 2 TensorCores: guarantee >=2 parallel steps when the
            # problem is big enough to split.
            tm = _round_up((rows + 1) // 2, sub_align)
            grid_m = pl.cdiv(rows, tm)

        def _slice_kernel(x_ref, o_ref):
            o_ref[...] = x_ref[:, :nv_prev]

        need = 2 * tm * (tn_in + tn_out) * itemsize  # in + out, double-buffered
        vmem_limit = int(min(48 << 20, max(16 << 20, (3 * need) // 2)))

        out2d = pl.pallas_call(
            _slice_kernel,
            out_shape=jax.ShapeDtypeStruct((rows, nv_prev), x.dtype),
            grid=(grid_m,),
            in_specs=[pl.BlockSpec((tm, tn_in), lambda i: (i, 0))],
            out_specs=pl.BlockSpec((tm, tn_out), lambda i: (i, 0)),
            compiler_params=pltpu.CompilerParams(
                dimension_semantics=("parallel",),
                vmem_limit_bytes=vmem_limit,
            ),
            cost_estimate=pl.CostEstimate(
                flops=0, transcendentals=0, bytes_accessed=bytes_accessed),
        )(x2d)
        return out2d.reshape(*lead, nv_prev)

    # ---------------------------------------------------------------- path B
    # General case: tiled copy of the kept vertex prefix only (discarded tail
    # never leaves HBM).
    #
    # Lane tile: largest 128-multiple divisor of nv_pad whose minimal block
    # (sub_align rows) fits the hard cap.  The divisor choice caps the total
    # overread at <=127 lanes and keeps all *input* blocks fully in-bounds;
    # only the final *output* lane block has a masked ragged edge.
    units = nv_pad // 128
    tn = 128
    for k in range(1, units + 1):
        if units % k:
            continue
        cand = (units // k) * 128
        if cand * sub_align * itemsize <= max_block:
            tn = cand
            break

    # Sublane (row) tile from the remaining byte budget: grows past 1024 when
    # nv_prev is small, shrinks when the lane tile is wide.
    tm = max(sub_align, (target // (tn * itemsize)) // sub_align * sub_align)
    tm = rows if rows <= tm else tm

    grid_m = pl.cdiv(rows, tm)
    grid_n = pl.cdiv(nv_prev, tn)

    if grid_m == 1 and grid_n == 1:
        # Guarantee >=2 parallel grid steps where possible (v7x: 2 TCs).
        if rows >= 2 * sub_align:
            tm = _round_up((rows + 1) // 2, sub_align)
            grid_m = pl.cdiv(rows, tm)
        elif units >= 2:
            for k in range(2, units + 1):
                if units % k == 0:
                    tn = (units // k) * 128
                    grid_n = pl.cdiv(nv_prev, tn)
                    break

    need = 4 * tm * tn * itemsize  # (in + out) blocks, double-buffered
    vmem_limit = int(min(48 << 20, max(16 << 20, (3 * need) // 2)))

    out2d = pl.pallas_call(
        _copy_kernel,
        out_shape=jax.ShapeDtypeStruct((rows, nv_prev), x.dtype),
        grid=(grid_m, grid_n),
        in_specs=[pl.BlockSpec((tm, tn), lambda i, j: (i, j))],
        out_specs=pl.BlockSpec((tm, tn), lambda i, j: (i, j)),
        compiler_params=pltpu.CompilerParams(
            dimension_semantics=("parallel", "parallel"),
            vmem_limit_bytes=vmem_limit,
        ),
        cost_estimate=pl.CostEstimate(
            flops=0, transcendentals=0, bytes_accessed=bytes_accessed),
    )(x2d)
    return out2d.reshape(*lead, nv_prev)


if __name__ == "__main__":
    key = jax.random.PRNGKey(0)
    k1, k2, k3, k4 = jax.random.split(key, 4)

    # Test 1: tiny icosahedral mesh (level-1: 42 vertices -> keep 12); path A.
    x1 = jax.random.normal(k1, (2, 4, 42), dtype=jnp.float32)
    out1 = jax.block_until_ready(downsamp(x1, 12))
    assert out1.shape == (2, 4, 12)
    assert jnp.array_equal(out1, x1[..., :12])

    # Test 2: level-3 mesh (2562 -> keep 642); general path, row-split grid.
    x2 = jax.random.normal(k2, (2, 8, 2562), dtype=jnp.float32)
    out2 = jax.block_until_ready(downsamp(x2, 642))
    assert out2.shape == (2, 8, 642)
    assert jnp.array_equal(out2, x2[..., :642])

    # Test 3: few rows -> forced lane-split grid + masked ragged output edge.
    x3 = jax.random.normal(k3, (1, 8, 2562), dtype=jnp.float32)
    out3 = jax.block_until_ready(downsamp(x3, 642))
    assert out3.shape == (1, 8, 642)
    assert jnp.array_equal(out3, x3[..., :642])

    # Test 4: bf16 (dtype-aware sublane alignment), level-4 mesh 10242 -> 2562.
    x4 = jax.random.normal(k4, (2, 6, 10242), dtype=jnp.bfloat16)
    out4 = jax.block_until_ready(downsamp(x4, 2562))
    assert out4.shape == (2, 6, 2562)
    assert jnp.array_equal(out4, x4[..., :2562])

    print("KERNEL_OK")
</pallas_src>

<mosaic_0001>
module attributes {stable_mosaic.version = 11 : i64} {
  func.func @_slice_kernel(%arg0: i32, %arg1: memref<8x42xf32, #tpu.memory_space<vmem>>, %arg2: memref<8x12xf32, #tpu.memory_space<vmem>>) attributes {dimension_semantics = [#tpu.dimension_semantics<parallel>], iteration_bounds = array<i64: 1>, scalar_prefetch = 0 : i64, scratch_operands = 0 : i64, tpu.core_type = #tpu.core_type<tc>, window_params = [{transform_indices = @transform_0, window_bounds = array<i64: 8, 42>}, {transform_indices = @transform_1, window_bounds = array<i64: 8, 12>}]} {
    %c0 = arith.constant 0 : index
    %c0_0 = arith.constant 0 : index
    %0 = vector.load %arg1[%c0, %c0_0] : memref<8x42xf32, #tpu.memory_space<vmem>>, vector<8x12xf32>
    %c0_1 = arith.constant 0 : index
    %c0_2 = arith.constant 0 : index
    %1 = vector.load %arg2[%c0_1, %c0_2] : memref<8x12xf32, #tpu.memory_space<vmem>>, vector<8x12xf32>
    tpu.vector_store %arg2[%c0_1, %c0_2], %0 {strides = array<i32>} : memref<8x12xf32, #tpu.memory_space<vmem>>, vector<8x12xf32>,
    return
  }
  func.func @transform_0(%arg0: i32) -> (i32, i32) {
    %c0_i32 = arith.constant 0 : i32
    %c0_i32_0 = arith.constant 0 : i32
    return %arg0, %c0_i32 : i32, i32
  }
  func.func @transform_1(%arg0: i32) -> (i32, i32) {
    %c0_i32 = arith.constant 0 : i32
    %c0_i32_0 = arith.constant 0 : i32
    return %arg0, %c0_i32 : i32, i32
  }
}

</mosaic_0001>

<llo_original>
// kernel: tpu_custom_call.1
$region0: #{tpu_custom_call.1}
  #allocation0 [shape = 'u32[]', space=smem, size = 0x4, offset = 0x4, fixed_abs, tag = 'smem constant byte address 0x4 - core index']
  #allocation1 [shape = 'u32[72,128]{1,0:T(1,128)}', space=vmem, size = 0x9000, scoped, tag = 'internal scratch']
  %s0 = inlined_call_operand.hbm [shape: f32[8,42], index: 0, kind: input, shape index: {}]
  %s1 = inlined_call_operand.hbm [shape: f32[8,12], index: 1, kind: output, shape index: {}]
  %s2 = sld [smem:[#allocation0]]
  $region18: #{tpu_custom_call.1} parent=0
    _
  %s4 = ssub.s32 1, %s2
  %s5 = scalar_select 0, %s4, %s2
  $region1: #{tpu_custom_call.1} parent=0
    #allocation2 [shape = 'u8[4096]{0}', space=vmem, size = 0x1000, scoped, tag = 'input window, operand 0, single buffered']
    #allocation3 [shape = 's32[1]{0}', space=sflag, size = 0x4, scoped, tag = 'scoped memory for tpu_custom_call.1']
    #allocation4 [shape = 's32[1]{0}', space=sflag, size = 0x4, scoped, tag = 'scoped memory for tpu_custom_call.1']
    #allocation5 [shape = 'u8[4096]{0}', space=vmem, size = 0x1000, scoped, tag = 'output window, operand 0, single buffered']
    %6 = vsyncpa [#allocation3], 0
    %7 = vsyncpa [#allocation4], 0
    // Predicated region
    $region2: #{tpu_custom_call.1} parent=1 // pred_check
      _
    $region3: #{tpu_custom_call.1} parent=1 // pred_check_branch
      %9 = sbr.rel (0) target = $region5
    $region4: #{tpu_custom_call.1} parent=1 // pred_region
      %11 = vsyncadd [#allocation3], 0
      %s13 = sshll.u32 %s0, 4
      %s14 = int_to_ptr.hbm [resolvable:$true] %s13
      %s15 = sshll.u32 [#allocation2], 4
      %s16 = int_to_ptr.vmem [resolvable:$true] %s15
      %18 = dma.hbm_to_vmem [thread:$0]  %s14, 128, %s16, [#allocation3]
    $region5: #{tpu_custom_call.1} parent=1 // pred_fallthru
      _
    // Predicated region
    $region6: #{tpu_custom_call.1} parent=1 // pred_check
      _
    $region7: #{tpu_custom_call.1} parent=1 // pred_check_branch
      %20 = sbr.rel (0) target = $region9
    $region8: #{tpu_custom_call.1} parent=1 // pred_region
      %22 = dma.done [#allocation3], 128
    $region9: #{tpu_custom_call.1} parent=1 // pred_fallthru
      _
    %v23 = vld [vmem:[#allocation2] sm:$0xff]
    %vm24 = vcmask 97280
    %25 = vst.msk [vmem:[#allocation5] sm:$0xff] %vm24, %v23
    // Predicated region
    $region10: #{tpu_custom_call.1} parent=1 // pred_check
      _
    $region11: #{tpu_custom_call.1} parent=1 // pred_check_branch
      %27 = sbr.rel (0) target = $region13
    $region12: #{tpu_custom_call.1} parent=1 // pred_region
      %29 = vsyncadd [#allocation4], 0
      %s31 = sshll.u32 [#allocation5], 4
      %s32 = int_to_ptr.vmem [resolvable:$true] %s31
      %s33 = sshll.u32 %s1, 4
      %s34 = int_to_ptr.hbm [resolvable:$true] %s33
      %36 = dma.vmem_to_hbm [thread:$0]  %s32, 128, %s34, [#allocation4]
    $region13: #{tpu_custom_call.1} parent=1 // pred_fallthru
      _
    // Predicated region
    $region14: #{tpu_custom_call.1} parent=1 // pred_check
      _
    $region15: #{tpu_custom_call.1} parent=1 // pred_check_branch
      %38 = sbr.rel (0) target = $region17
    $region16: #{tpu_custom_call.1} parent=1 // pred_region
      %40 = dma.done [#allocation4], 128
    $region17: #{tpu_custom_call.1} parent=1 // pred_fallthru
      _
    %41 = vsyncpa [#allocation3], 1
    %42 = vsyncpa [#allocation4], 1

</llo_original>
